<compile_context>
chip_gen: v5e
topology: v5e:2x2
jax: 0.10.0
libtpu: 0.0.40
codegen_flags: <defaults>
</compile_context>

<pallas_src>
import jax
import jax.numpy as jnp
from jax import lax
from jax.experimental import pallas as pl
from jax.experimental.pallas import tpu as pltpu

# Model dims: water molecule = 3 atoms x 3 coords = 9 input features.
IN_DIM = 9
HIDDEN = 32
N_QUBITS = 4
OUT_DIM = 1

_MAX_TB = 2048     # batch rows per grid step (multiple of 128)
_SPLIT_MIN = 1024  # above this, force >= 2 tiles so both v7x TensorCores get work


def _round_up(n, m):
    return ((n + m - 1) // m) * m


def _pick_tile(b):
    """Batch-tile size: big tiles to amortize per-step overhead, but keep
    at least 2 tiles for large batches so the 'parallel' grid axis spans
    both TensorCores on v7x."""
    if b >= 2 * _MAX_TB:
        return _MAX_TB
    if b >= _SPLIT_MIN:
        return _round_up((b + 1) // 2, 128)   # exactly 2 tiles
    return _round_up(b, 8)                    # small batch: single 8-aligned tile


def hybrid_kernel(x_ref,                    # [TB, IN_DIM]
                  w1t_ref, b1_ref,          # [HIDDEN, IN_DIM],   [HIDDEN, 1]
                  w2t_ref, b2_ref,          # [N_QUBITS, HIDDEN], [N_QUBITS, 1]
                  w3t_ref, b3_ref,          # [HIDDEN, N_QUBITS], [HIDDEN, 1]
                  w4t_ref, b4_ref,          # [OUT_DIM, HIDDEN],  [OUT_DIM, 1]
                  o_ref):                   # [OUT_DIM, TB]  (lane-dense output)
    x = x_ref[...].astype(jnp.float32)      # [TB, 9]; upcast if fed as bf16

    # ---- Encoder layer 1 (MXU): h1t = relu(W1^T @ x^T + b1).
    # NT matmul (both operands contract their last dim); lhs is the tiny
    # resident [32, 9] weight, result lands batch-on-lanes with no activation
    # relayout downstream.
    h1t = lax.dot_general(
        w1t_ref[...], x,
        dimension_numbers=(((1,), (1,)), ((), ())),
        preferred_element_type=jnp.float32)                          # [32, TB]
    h1t = jnp.maximum(h1t + b1_ref[...], 0.0)

    # ---- Encoder layer 2 (MXU, canonical): [4, 32] @ [32, TB]
    enc_t = jnp.dot(w2t_ref[...], h1t,
                    preferred_element_type=jnp.float32) + b2_ref[...]  # [4, TB]

    # ---- run_quantum_circuit ----
    # TODO(synk): the PennyLane circuit has no Pallas equivalent; simulated
    # analytically: RY(theta)|0> measured in Z gives <Z> = cos(theta)  (EUP op).
    q_t = jnp.cos(enc_t)                                             # [4, TB]

    # ---- Decoder layer 1 (MXU, canonical, K=4 padded): [32, 4] @ [4, TB]
    h2t = jnp.dot(w3t_ref[...], q_t,
                  preferred_element_type=jnp.float32) + b3_ref[...]   # [32, TB]
    h2t = jnp.maximum(h2t, 0.0)

    # ---- Decoder layer 2 (MXU, canonical, M=1): [1, 32] @ [32, TB]
    out_t = jnp.dot(w4t_ref[...], h2t,
                    preferred_element_type=jnp.float32) + b4_ref[...]  # [1, TB]

    o_ref[...] = out_t.astype(o_ref.dtype)


def hybrid_forward(x, params):
    """x: [B, IN_DIM] (f32 or bf16). Returns [B, OUT_DIM] float32."""
    w1, b1, w2, b2, w3, b3, w4, b4 = params
    b = x.shape[0]

    tb = _pick_tile(b)
    b_pad = _round_up(b, tb)
    if b_pad != b:
        x = jnp.pad(x, ((0, b_pad - b), (0, 0)))
    n_tiles = b_pad // tb

    # Kernel-side parameter layout: weights transposed so activations run as
    # [features, batch_tile]; biases as column vectors (broadcast along lanes).
    kparams = (w1.T, b1.reshape(HIDDEN, 1),
               w2.T, b2.reshape(N_QUBITS, 1),
               w3.T, b3.reshape(HIDDEN, 1),
               w4.T, b4.reshape(OUT_DIM, 1))

    def resident(shape):
        # Full-array block with a constant index_map: fetched once, stays in
        # VMEM across all grid steps (no re-DMA per step).
        return pl.BlockSpec(shape, lambda i: (0,) * len(shape))

    cost = pl.CostEstimate(
        flops=2 * b * (IN_DIM * HIDDEN + HIDDEN * N_QUBITS
                       + N_QUBITS * HIDDEN + HIDDEN * OUT_DIM),
        transcendentals=b * N_QUBITS,
        bytes_accessed=int(b * IN_DIM * x.dtype.itemsize
                           + b * OUT_DIM * 4
                           + sum(int(p.size) * 4 for p in kparams)),
    )

    out_t = pl.pallas_call(
        hybrid_kernel,
        out_shape=jax.ShapeDtypeStruct((OUT_DIM, b_pad), jnp.float32),
        grid=(n_tiles,),
        in_specs=[pl.BlockSpec((tb, IN_DIM), lambda i: (i, 0))]
                 + [resident(p.shape) for p in kparams],
        out_specs=pl.BlockSpec((OUT_DIM, tb), lambda i: (0, i)),
        compiler_params=pltpu.CompilerParams(
            dimension_semantics=("parallel",),      # megacore sharding on v7x
            vmem_limit_bytes=32 * 1024 * 1024),     # explicit, safe on v5e/v6e/v7x
        cost_estimate=cost,
    )(x, *kparams)

    # [1, B_pad] -> slice padding -> [B, 1] (row-major reshape, no data movement).
    return out_t[:, :b].reshape(b, OUT_DIM)


def init_params(key):
    """Deterministic parameter init (shapes follow the torch Linear layers)."""
    ks = jax.random.split(key, 4)

    def linear(k, fan_in, fan_out):
        # torch.nn.Linear default init: U(-1/sqrt(fan_in), 1/sqrt(fan_in))
        bound = float(fan_in) ** -0.5
        kw, kb = jax.random.split(k)
        w = jax.random.uniform(kw, (fan_in, fan_out), jnp.float32, -bound, bound)
        bvec = jax.random.uniform(kb, (fan_out,), jnp.float32, -bound, bound)
        return w, bvec

    w1, b1 = linear(ks[0], IN_DIM, HIDDEN)
    w2, b2 = linear(ks[1], HIDDEN, N_QUBITS)
    w3, b3 = linear(ks[2], N_QUBITS, HIDDEN)
    w4, b4 = linear(ks[3], HIDDEN, OUT_DIM)
    return (w1, b1, w2, b2, w3, b3, w4, b4)


def reference_forward(x, params):
    """Pure-JAX reference for a sanity check."""
    w1, b1, w2, b2, w3, b3, w4, b4 = params
    x = x.astype(jnp.float32)
    h1 = jnp.maximum(x @ w1 + b1, 0.0)
    q = jnp.cos(h1 @ w2 + b2)
    h2 = jnp.maximum(q @ w3 + b3, 0.0)
    return h2 @ w4 + b4


if __name__ == "__main__":
    key = jax.random.PRNGKey(0)
    k_x, k_p = jax.random.split(key)
    params = init_params(k_p)

    # Small shape consistent with the module (3 atoms x 3 coords = 9 features).
    batch = 8
    x = jax.random.normal(k_x, (batch, IN_DIM), jnp.float32)
    out = jax.block_until_ready(hybrid_forward(x, params))
    ref = reference_forward(x, params)
    assert out.shape == (batch, OUT_DIM)
    assert jnp.allclose(out, ref, atol=5e-4, rtol=5e-4)

    # Multi-tile pipelined path: 2 tiles of 1280 (padded last tile), exercising
    # the megacore-parallel batch grid.
    batch2 = 2500
    x2 = jax.random.normal(jax.random.fold_in(k_x, 1), (batch2, IN_DIM), jnp.float32)
    out2 = jax.block_until_ready(hybrid_forward(x2, params))
    ref2 = reference_forward(x2, params)
    assert out2.shape == (batch2, OUT_DIM)
    assert jnp.allclose(out2, ref2, atol=5e-4, rtol=5e-4)

    # bf16 input path (halves the dominant HBM read stream); kernel upcasts to
    # f32 internally, so compare against the f32 reference on the same bf16 data.
    x3 = x2.astype(jnp.bfloat16)
    out3 = jax.block_until_ready(hybrid_forward(x3, params))
    ref3 = reference_forward(x3, params)
    assert out3.shape == (batch2, OUT_DIM)
    assert jnp.allclose(out3, ref3, atol=5e-4, rtol=5e-4)

    print("KERNEL_OK")
</pallas_src>

<mosaic_0001>
module attributes {stable_mosaic.version = 11 : i64} {
  func.func @hybrid_kernel(%arg0: i32, %arg1: memref<8x9xf32, #tpu.memory_space<vmem>>, %arg2: memref<32x9xf32, #tpu.memory_space<vmem>>, %arg3: memref<32x1xf32, #tpu.memory_space<vmem>>, %arg4: memref<4x32xf32, #tpu.memory_space<vmem>>, %arg5: memref<4x1xf32, #tpu.memory_space<vmem>>, %arg6: memref<32x4xf32, #tpu.memory_space<vmem>>, %arg7: memref<32x1xf32, #tpu.memory_space<vmem>>, %arg8: memref<1x32xf32, #tpu.memory_space<vmem>>, %arg9: memref<1x1xf32, #tpu.memory_space<vmem>>, %arg10: memref<1x8xf32, #tpu.memory_space<vmem>>) attributes {dimension_semantics = [#tpu.dimension_semantics<parallel>], iteration_bounds = array<i64: 1>, scalar_prefetch = 0 : i64, scratch_operands = 0 : i64, tpu.core_type = #tpu.core_type<tc>, window_params = [{transform_indices = @transform_0, window_bounds = array<i64: 8, 9>}, {pipeline_mode = #tpu.pipeline_mode<synchronous>, transform_indices = @transform_1, window_bounds = array<i64: 32, 9>}, {pipeline_mode = #tpu.pipeline_mode<synchronous>, transform_indices = @transform_2, window_bounds = array<i64: 32, 1>}, {pipeline_mode = #tpu.pipeline_mode<synchronous>, transform_indices = @transform_3, window_bounds = array<i64: 4, 32>}, {pipeline_mode = #tpu.pipeline_mode<synchronous>, transform_indices = @transform_4, window_bounds = array<i64: 4, 1>}, {pipeline_mode = #tpu.pipeline_mode<synchronous>, transform_indices = @transform_5, window_bounds = array<i64: 32, 4>}, {pipeline_mode = #tpu.pipeline_mode<synchronous>, transform_indices = @transform_6, window_bounds = array<i64: 32, 1>}, {pipeline_mode = #tpu.pipeline_mode<synchronous>, transform_indices = @transform_7, window_bounds = array<i64: 1, 32>}, {pipeline_mode = #tpu.pipeline_mode<synchronous>, transform_indices = @transform_8, window_bounds = array<i64: 1, 1>}, {transform_indices = @transform_9, window_bounds = array<i64: 1, 8>}]} {
    %c0 = arith.constant 0 : index
    %c0_0 = arith.constant 0 : index
    %0 = vector.load %arg1[%c0, %c0_0] : memref<8x9xf32, #tpu.memory_space<vmem>>, vector<8x9xf32>
    %c0_1 = arith.constant 0 : index
    %c0_2 = arith.constant 0 : index
    %1 = vector.load %arg2[%c0_1, %c0_2] : memref<32x9xf32, #tpu.memory_space<vmem>>, vector<32x9xf32>
    %cst = arith.constant dense<0.000000e+00> : vector<32x8xf32>
    %2 = tpu.matmul %1, %0, %cst {dimension_numbers = #tpu.dot_dimension_numbers<[1], [1], [0], [0], [0, 0, 1, 0], [], []>} : vector<32x9xf32>, vector<8x9xf32>, vector<32x8xf32> -> vector<32x8xf32>
    %c0_3 = arith.constant 0 : index
    %c0_4 = arith.constant 0 : index
    %3 = vector.load %arg3[%c0_3, %c0_4] : memref<32x1xf32, #tpu.memory_space<vmem>>, vector<32x1xf32>
    %4 = vector.broadcast %3 : vector<32x1xf32> to vector<32x8xf32>
    %5 = arith.addf %2, %4 : vector<32x8xf32>
    %cst_5 = arith.constant 0.000000e+00 : f32
    %6 = vector.broadcast %cst_5 : f32 to vector<32x8xf32>
    %7 = arith.maximumf %5, %6 : vector<32x8xf32>
    %c0_6 = arith.constant 0 : index
    %c0_7 = arith.constant 0 : index
    %8 = vector.load %arg4[%c0_6, %c0_7] : memref<4x32xf32, #tpu.memory_space<vmem>>, vector<4x32xf32>
    %cst_8 = arith.constant dense<0.000000e+00> : vector<4x8xf32>
    %9 = tpu.matmul %8, %7, %cst_8 {dimension_numbers = #tpu.dot_dimension_numbers<[1], [0], [0], [1], [0, 0, 1, 1], [], []>} : vector<4x32xf32>, vector<32x8xf32>, vector<4x8xf32> -> vector<4x8xf32>
    %c0_9 = arith.constant 0 : index
    %c0_10 = arith.constant 0 : index
    %10 = vector.load %arg5[%c0_9, %c0_10] : memref<4x1xf32, #tpu.memory_space<vmem>>, vector<4x1xf32>
    %11 = vector.broadcast %10 : vector<4x1xf32> to vector<4x8xf32>
    %12 = arith.addf %9, %11 : vector<4x8xf32>
    %13 = math.cos %12 : vector<4x8xf32>
    %c0_11 = arith.constant 0 : index
    %c0_12 = arith.constant 0 : index
    %14 = vector.load %arg6[%c0_11, %c0_12] : memref<32x4xf32, #tpu.memory_space<vmem>>, vector<32x4xf32>
    %cst_13 = arith.constant dense<0.000000e+00> : vector<32x8xf32>
    %15 = tpu.matmul %14, %13, %cst_13 {dimension_numbers = #tpu.dot_dimension_numbers<[1], [0], [0], [1], [0, 0, 1, 1], [], []>} : vector<32x4xf32>, vector<4x8xf32>, vector<32x8xf32> -> vector<32x8xf32>
    %c0_14 = arith.constant 0 : index
    %c0_15 = arith.constant 0 : index
    %16 = vector.load %arg7[%c0_14, %c0_15] : memref<32x1xf32, #tpu.memory_space<vmem>>, vector<32x1xf32>
    %17 = vector.broadcast %16 : vector<32x1xf32> to vector<32x8xf32>
    %18 = arith.addf %15, %17 : vector<32x8xf32>
    %cst_16 = arith.constant 0.000000e+00 : f32
    %19 = vector.broadcast %cst_16 : f32 to vector<32x8xf32>
    %20 = arith.maximumf %18, %19 : vector<32x8xf32>
    %c0_17 = arith.constant 0 : index
    %c0_18 = arith.constant 0 : index
    %21 = vector.load %arg8[%c0_17, %c0_18] : memref<1x32xf32, #tpu.memory_space<vmem>>, vector<1x32xf32>
    %cst_19 = arith.constant dense<0.000000e+00> : vector<1x8xf32>
    %22 = tpu.matmul %21, %20, %cst_19 {dimension_numbers = #tpu.dot_dimension_numbers<[1], [0], [0], [1], [0, 0, 1, 1], [], []>} : vector<1x32xf32>, vector<32x8xf32>, vector<1x8xf32> -> vector<1x8xf32>
    %c0_20 = arith.constant 0 : index
    %c0_21 = arith.constant 0 : index
    %23 = vector.load %arg9[%c0_20, %c0_21] : memref<1x1xf32, #tpu.memory_space<vmem>>, vector<1x1xf32>
    %24 = vector.broadcast %23 : vector<1x1xf32> to vector<1x8xf32>
    %25 = arith.addf %22, %24 : vector<1x8xf32>
    %c0_22 = arith.constant 0 : index
    %c0_23 = arith.constant 0 : index
    %26 = vector.load %arg10[%c0_22, %c0_23] : memref<1x8xf32, #tpu.memory_space<vmem>>, vector<1x8xf32>
    tpu.vector_store %arg10[%c0_22, %c0_23], %25 {strides = array<i32>} : memref<1x8xf32, #tpu.memory_space<vmem>>, vector<1x8xf32>,
    return
  }
  func.func @transform_0(%arg0: i32) -> (i32, i32) {
    %c0_i32 = arith.constant 0 : i32
    %c0_i32_0 = arith.constant 0 : i32
    return %arg0, %c0_i32 : i32, i32
  }
  func.func @transform_1(%arg0: i32) -> (i32, i32) {
    %c0_i32 = arith.constant 0 : i32
    %c0_i32_0 = arith.constant 0 : i32
    %c0_i32_1 = arith.constant 0 : i32
    return %c0_i32, %c0_i32_0 : i32, i32
  }
  func.func @transform_2(%arg0: i32) -> (i32, i32) {
    %c0_i32 = arith.constant 0 : i32
    %c0_i32_0 = arith.constant 0 : i32
    %c0_i32_1 = arith.constant 0 : i32
    return %c0_i32, %c0_i32_0 : i32, i32
  }
  func.func @transform_3(%arg0: i32) -> (i32, i32) {
    %c0_i32 = arith.constant 0 : i32
    %c0_i32_0 = arith.constant 0 : i32
    %c0_i32_1 = arith.constant 0 : i32
    return %c0_i32, %c0_i32_0 : i32, i32
  }
  func.func @transform_4(%arg0: i32) -> (i32, i32) {
    %c0_i32 = arith.constant 0 : i32
    %c0_i32_0 = arith.constant 0 : i32
    %c0_i32_1 = arith.constant 0 : i32
    return %c0_i32, %c0_i32_0 : i32, i32
  }
  func.func @transform_5(%arg0: i32) -> (i32, i32) {
    %c0_i32 = arith.constant 0 : i32
    %c0_i32_0 = arith.constant 0 : i32
    %c0_i32_1 = arith.constant 0 : i32
    return %c0_i32, %c0_i32_0 : i32, i32
  }
  func.func @transform_6(%arg0: i32) -> (i32, i32) {
    %c0_i32 = arith.constant 0 : i32
    %c0_i32_0 = arith.constant 0 : i32
    %c0_i32_1 = arith.constant 0 : i32
    return %c0_i32, %c0_i32_0 : i32, i32
  }
  func.func @transform_7(%arg0: i32) -> (i32, i32) {
    %c0_i32 = arith.constant 0 : i32
    %c0_i32_0 = arith.constant 0 : i32
    %c0_i32_1 = arith.constant 0 : i32
    return %c0_i32, %c0_i32_0 : i32, i32
  }
  func.func @transform_8(%arg0: i32) -> (i32, i32) {
    %c0_i32 = arith.constant 0 : i32
    %c0_i32_0 = arith.constant 0 : i32
    %c0_i32_1 = arith.constant 0 : i32
    return %c0_i32, %c0_i32_0 : i32, i32
  }
  func.func @transform_9(%arg0: i32) -> (i32, i32) {
    %c0_i32 = arith.constant 0 : i32
    %c0_i32_0 = arith.constant 0 : i32
    return %c0_i32, %arg0 : i32, i32
  }
}

</mosaic_0001>

<llo_original>
// kernel: tpu_custom_call.1
$region0: #{tpu_custom_call.1}
  #allocation0 [shape = 'u32[]', space=smem, size = 0x4, offset = 0x4, fixed_abs, tag = 'smem constant byte address 0x4 - core index']
  #allocation1 [shape = 'u32[72,128]{1,0:T(1,128)}', space=vmem, size = 0x9000, scoped, tag = 'internal scratch']
  #allocation2 [shape = 'f32[1,1]{1,0:T(1,128)S(1)}', space=vmem, size = 0x200, scoped, tag = 'scoped memory for tpu_custom_call.1']
  %s0 = inlined_call_operand.vmem [shape: f32[8,9], index: 0, kind: input, shape index: {}]
  %s1 = inlined_call_operand.vmem [shape: f32[32,9], index: 1, kind: input, shape index: {}]
  %s2 = inlined_call_operand.vmem [shape: f32[32,1], index: 2, kind: input, shape index: {}]
  %s3 = inlined_call_operand.vmem [shape: f32[4,32], index: 3, kind: input, shape index: {}]
  %s4 = inlined_call_operand.vmem [shape: f32[4,1], index: 4, kind: input, shape index: {}]
  %s5 = inlined_call_operand.vmem [shape: f32[32,4], index: 5, kind: input, shape index: {}]
  %s6 = inlined_call_operand.vmem [shape: f32[32,1], index: 6, kind: input, shape index: {}]
  %s7 = inlined_call_operand.vmem [shape: f32[1,32], index: 7, kind: input, shape index: {}]
  %s8 = inlined_call_operand.<no memory space> [shape: f32[1,1], index: 8, kind: input, shape index: {}]
  %s9 = inlined_call_operand.hbm [shape: f32[1,8], index: 9, kind: output, shape index: {}]
  %s10 = sld [smem:[#allocation0]]
  $region46: #{tpu_custom_call.1} parent=0
    _
  %s12 = ssub.s32 1, %s10
  %s13 = scalar_select 0, %s12, %s10
  %v14 = vstv %s8
  %15 = vst [vmem:[#allocation2] sm:$0x1] %v14
  $region1: #{tpu_custom_call.1} parent=0
    #allocation3 [shape = 'u8[512]{0}', space=vmem, size = 0x400, scoped, tag = 'output window, operand 0, single buffered']
    #allocation4 [shape = 's32[1]{0}', space=sflag, size = 0x4, scoped, tag = 'scoped memory for tpu_custom_call.1']
    %16 = vsyncpa [#allocation4], 0
    // Predicated region
    $region2: #{tpu_custom_call.1} parent=1 // pred_check
      _
    $region3: #{tpu_custom_call.1} parent=1 // pred_check_branch
      %18 = sbr.rel (0) target = $region5
    $region4: #{tpu_custom_call.1} parent=1 // pred_region
      _
    $region5: #{tpu_custom_call.1} parent=1 // pred_fallthru
      _
    // Predicated region
    $region6: #{tpu_custom_call.1} parent=1 // pred_check
      _
    $region7: #{tpu_custom_call.1} parent=1 // pred_check_branch
      %20 = sbr.rel (0) target = $region9
    $region8: #{tpu_custom_call.1} parent=1 // pred_region
      _
    $region9: #{tpu_custom_call.1} parent=1 // pred_fallthru
      _
    // Predicated region
    $region10: #{tpu_custom_call.1} parent=1 // pred_check
      _
    $region11: #{tpu_custom_call.1} parent=1 // pred_check_branch
      %22 = sbr.rel (0) target = $region13
    $region12: #{tpu_custom_call.1} parent=1 // pred_region
      _
    $region13: #{tpu_custom_call.1} parent=1 // pred_fallthru
      _
    // Predicated region
    $region14: #{tpu_custom_call.1} parent=1 // pred_check
      _
    $region15: #{tpu_custom_call.1} parent=1 // pred_check_branch
      %24 = sbr.rel (0) target = $region17
    $region16: #{tpu_custom_call.1} parent=1 // pred_region
      _
    $region17: #{tpu_custom_call.1} parent=1 // pred_fallthru
      _
    // Predicated region
    $region18: #{tpu_custom_call.1} parent=1 // pred_check
      _
    $region19: #{tpu_custom_call.1} parent=1 // pred_check_branch
      %26 = sbr.rel (0) target = $region21
    $region20: #{tpu_custom_call.1} parent=1 // pred_region
      _
    $region21: #{tpu_custom_call.1} parent=1 // pred_fallthru
      _
    // Predicated region
    $region22: #{tpu_custom_call.1} parent=1 // pred_check
      _
    $region23: #{tpu_custom_call.1} parent=1 // pred_check_branch
      %28 = sbr.rel (0) target = $region25
    $region24: #{tpu_custom_call.1} parent=1 // pred_region
      _
    $region25: #{tpu_custom_call.1} parent=1 // pred_fallthru
      _
    // Predicated region
    $region26: #{tpu_custom_call.1} parent=1 // pred_check
      _
    $region27: #{tpu_custom_call.1} parent=1 // pred_check_branch
      %30 = sbr.rel (0) target = $region29
    $region28: #{tpu_custom_call.1} parent=1 // pred_region
      _
    $region29: #{tpu_custom_call.1} parent=1 // pred_fallthru
      _
    // Predicated region
    $region30: #{tpu_custom_call.1} parent=1 // pred_check
      _
    $region31: #{tpu_custom_call.1} parent=1 // pred_check_branch
      %32 = sbr.rel (0) target = $region33
    $region32: #{tpu_custom_call.1} parent=1 // pred_region
      _
    $region33: #{tpu_custom_call.1} parent=1 // pred_fallthru
      _
    // Predicated region
    $region34: #{tpu_custom_call.1} parent=1 // pred_check
      _
    $region35: #{tpu_custom_call.1} parent=1 // pred_check_branch
      %34 = sbr.rel (0) target = $region37
    $region36: #{tpu_custom_call.1} parent=1 // pred_region
      _
    $region37: #{tpu_custom_call.1} parent=1 // pred_fallthru
      _
    %v35 = vld [vmem:[%s0] sm:$0xff]
    %v36 = vld [vmem:[%s1] sm:$0xff]
    %v37 = vld [vmem:[%s1 + $0x8] sm:$0xff]
    %v38 = vld [vmem:[%s1 + $0x10] sm:$0xff]
    %v39 = vld [vmem:[%s1 + $0x18] sm:$0xff]
    %v40 = vld [vmem:[%s2] sm:$0xff]
    %v41 = vld [vmem:[%s2 + $0x8] sm:$0xff]
    %v42 = vld [vmem:[%s2 + $0x10] sm:$0xff]
    %v43 = vld [vmem:[%s2 + $0x18] sm:$0xff]
    %45 = vset.pattern.permute.xlu0 0
    %46 = vperm.xlu0 %45, %v40
    %v47 = vpop.permute.xlu0 %46
    %50 = vset.pattern.permute.xlu0 0
    %51 = vperm.xlu0 %50, %v41
    %v52 = vpop.permute.xlu0 %51
    %55 = vset.pattern.permute.xlu0 0
    %56 = vperm.xlu0 %55, %v42
    %v57 = vpop.permute.xlu0 %56
    %60 = vset.pattern.permute.xlu0 0
    %61 = vperm.xlu0 %60, %v43
    %v62 = vpop.permute.xlu0 %61
    %vm64 = vcmask 72704
    %v66 = vsel %vm64, %v36, 0
    %v69 = vsel %vm64, %v37, 0
    %v72 = vsel %vm64, %v38, 0
    %v75 = vsel %vm64, %v39, 0
    %v78 = vsel %vm64, %v35, 0
    %80 = vmatpush.xpose.msra.mxu0 0.0
    %81 = vmatpush.xpose.msra.mxu0 0.0
    %82 = vmatpush.xpose.msra.mxu0 0.0
    %83 = vmatpush.xpose.msra.mxu0 0.0
    %84 = vmatpush.xpose.msra.mxu0 0.0
    %85 = vmatpush.xpose.msra.mxu0 0.0
    %86 = vmatpush.xpose.msra.mxu0 0.0
    %87 = vmatpush.xpose.msra.mxu0 0.0
    %88 = vmatpush.xpose.msra.mxu0 0.0
    %89 = vmatpush.xpose.msra.mxu0 0.0
    %90 = vmatpush.xpose.msra.mxu0 0.0
    %91 = vmatpush.xpose.msra.mxu0 0.0
    %92 = vmatpush.xpose.msra.mxu0 0.0
    %93 = vmatpush.xpose.msra.mxu0 0.0
    %94 = vmatpush.xpose.msra.mxu0 0.0
    %95 = vmatpush.xpose.msra.mxu0 %v78
    %96 = vmatmul.f32.gmra.mxu0 %v66
    %v97 = vpop.f32.mrf.mxu0
    %v98 = vadd.f32 %v47, %v97
    %99 = vmatmul.f32.gmra.mxu0 %v69
    %v100 = vpop.f32.mrf.mxu0
    %v101 = vadd.f32 %v52, %v100
    %102 = vmatmul.f32.gmra.mxu0 %v72
    %v103 = vpop.f32.mrf.mxu0
    %v104 = vadd.f32 %v57, %v103
    %105 = vmatmul.f32.gmra.mxu0 %v75
    %v106 = vpop.f32.mrf.mxu0
    %v107 = vadd.f32 %v62, %v106
    %108 = vdwg.mxu0
    %v109 = vmax.f32 %v98, 0.0
    %v110 = vmax.f32 %v101, 0.0
    %v111 = vmax.f32 %v104, 0.0
    %v112 = vmax.f32 %v107, 0.0
    %v113 = vld [vmem:[%s3] sm:$0xf]
    %v114 = vld [vmem:[%s4] sm:$0xf]
    %116 = vset.pattern.permute.xlu0 0
    %117 = vperm.xlu0 %116, %v114
    %v118 = vpop.permute.xlu0 %117
    %vm120 = vcmask 261120
    %v122 = vsel %vm120, %v113, 0
    %124 = vmatpush.msra.mxu0 0.0
    %125 = vmatpush.msra.mxu0 0.0
    %126 = vmatpush.msra.mxu0 0.0
    %127 = vmatpush.msra.mxu0 0.0
    %128 = vmatpush.msra.mxu0 0.0
    %129 = vmatpush.msra.mxu0 0.0
    %130 = vmatpush.msra.mxu0 0.0
    %131 = vmatpush.msra.mxu0 0.0
    %132 = vmatpush.msra.mxu0 0.0
    %133 = vmatpush.msra.mxu0 0.0
    %134 = vmatpush.msra.mxu0 0.0
    %135 = vmatpush.msra.mxu0 0.0
    %136 = vmatpush.msra.mxu0 %v112
    %137 = vmatpush.msra.mxu0 %v111
    %138 = vmatpush.msra.mxu0 %v110
    %139 = vmatpush.msra.mxu0 %v109
    %140 = vmatmul.f32.gmra.mxu0 %v122
    %v141 = vpop.f32.mrf.mxu0
    %v142 = vadd.f32 %v118, %v141
    %143 = vdwg.mxu0
    %v144 = vand.u32 2147483647, %v142
    %vm145 = vcmp.le.f32.partialorder %v144, 0.7853982
    %vm146 = vcmp.lt.s32.totalorder %v142, 0
    %v147 = vand.u32 %v142, 2139095040
    %v148 = vshrl.u32 %v147, 23
    %v149 = vsub.s32 %v148, 127
    %v150 = vand.u32 2147483647, %v142
    %v151 = vand.u32 %v150, 8388607
    %v152 = vor.u32 %v151, 8388608
    %v153 = vsub.s32 0, %v152
    %v154 = vadd.s32 %v149, 1
    %vm155 = vcmp.gt.s32.totalorder %v154, 0
    %v156 = vsel %vm155, %v154, 0
    %v157 = vshrl.u32 %v156, 5
    %v158 = vand.u32 %v156, 31
    %v159 = vsub.s32 32, %v158
    %v160 = vshrl.u32 683565275, %v159
    %v161 = vshll.u32 683565275, %v158
    %v162 = vshrl.u32 2475754826, %v159
    %v163 = vor.u32 %v161, %v162
    %v164 = vshll.u32 2475754826, %v158
    %v165 = vshrl.u32 2131351028, %v159
    %v166 = vor.u32 %v164, %v165
    %v167 = vshll.u32 2131351028, %v158
    %v168 = vshrl.u32 2102212464, %v159
    %v169 = vor.u32 %v167, %v168
    %v170 = vshll.u32 2102212464, %v158
    %v171 = vshrl.u32 920167782, %v159
    %v172 = vor.u32 %v170, %v171
    %v173 = vshll.u32 920167782, %v158
    %v174 = vshrl.u32 1326507024, %v159
    %v175 = vor.u32 %v173, %v174
    %vm176 = vcmp.lt.s32.totalorder %v157, 1
    %vm177 = vcmp.lt.s32.totalorder %v157, 2
    %vm178 = vcmp.lt.s32.totalorder %v157, 3
    %vm179 = vcmp.lt.s32.totalorder %v157, 4
    %v180 = vsel %vm176, %v160, %v163
    %v181 = vsel %vm179, %v169, 2102212464
    %v182 = vsel %vm178, %v166, %v181
    %v183 = vsel %vm177, %v180, %v182
    %v184 = vsel %vm176, %v163, %v166
    %v185 = vsel %vm179, %v172, 920167782
    %v186 = vsel %vm178, %v169, %v185
    %v187 = vsel %vm177, %v184, %v186
    %v188 = vsel %vm176, %v166, %v169
    %v189 = vsel %vm179, %v175, 1326507024
    %v190 = vsel %vm178, %v172, %v189
    %v191 = vsel %vm177, %v188, %v190
    %v192 = vshll.u32 %v152, 8
    %v193 = vand.u32 %v192, 65535
    %v194 = vshrl.u32 %v192, 16
    %v195 = vand.u32 %v191, 65535
    %v196 = vshrl.u32 %v191, 16
    %v197 = vmul.u32 %v193, %v195
    %v198 = vmul.u32 %v193, %v196
    %v199 = vmul.u32 %v194, %v195
    %v200 = vmul.u32 %v194, %v196
    %v201 = vshll.u32 %v198, 16
    %v202 = vshrl.u32 %v198, 16
    %v203 = vshll.u32 %v199, 16
    %v204 = vshrl.u32 %v199, 16
    %vm205 = vc.u32 %v197, %v201
    %v206 = vsel %vm205, 1, 0
    %v207 = vadd.s32 %v197, %v201
    %v208 = vadd.s32 %v200, %v206
    %vm209 = vc.u32 %v207, %v203
    %v210 = vsel %vm209, 1, 0
    %v211 = vadd.s32 %v207, %v203
    %v212 = vadd.s32 %v208, %v210
    %v213 = vadd.s32 %v212, %v202
    %v214 = vadd.s32 %v213, %v204
    %v215 = vand.u32 %v192, 65535
    %v216 = vshrl.u32 %v192, 16
    %v217 = vand.u32 %v187, 65535
    %v218 = vshrl.u32 %v187, 16
    %v219 = vmul.u32 %v215, %v217
    %v220 = vmul.u32 %v215, %v218
    %v221 = vmul.u32 %v216, %v217
    %v222 = vmul.u32 %v216, %v218
    %v223 = vshll.u32 %v220, 16
    %v224 = vshrl.u32 %v220, 16
    %v225 = vshll.u32 %v221, 16
    %v226 = vshrl.u32 %v221, 16
    %vm227 = vc.u32 %v219, %v223
    %v228 = vsel %vm227, 1, 0
    %v229 = vadd.s32 %v219, %v223
    %v230 = vadd.s32 %v222, %v228
    %vm231 = vc.u32 %v229, %v225
    %v232 = vsel %vm231, 1, 0
    %v233 = vadd.s32 %v229, %v225
    %v234 = vadd.s32 %v230, %v232
    %v235 = vadd.s32 %v234, %v224
    %v236 = vadd.s32 %v235, %v226
    %v237 = vmul.u32 %v192, %v183
    %v238 = vadd.s32 %v214, %v233
    %vm239 = vc.u32 %v214, %v233
    %v240 = vadd.s32 %v236, 1
    %v241 = vsel %vm239, %v240, %v236
    %v242 = vadd.s32 %v237, %v241
    %v243 = vadd.s32 %v242, 536870912
    %v244 = vshrl.u32 %v243, 30
    %v245 = vshll.u32 %v244, 30
    %v246 = vsub.s32 %v242, %v245
    %vm247 = vcmp.lt.s32.totalorder %v246, 0
    %v248 = vsub.s32 0, %v246
    %v249 = vsel %vm247, %v248, %v246
    %v250 = vclz %v249
    %v251 = vsub.s32 %v250, 2
    %vm252 = vcmp.gt.s32.totalorder 0, %v251
    %v253 = vsel %vm252, 0, %v251
    %v254 = vsub.s32 32, %v253
    %v255 = vshll.u32 %v246, %v253
    %v256 = vshrl.u32 %v238, %v254
    %v257 = vor.u32 %v255, %v256
    %v258 = vsub.s32 4294967266, %v253
    %v259 = vadd.s32 %v258, 127
    %v260 = vshll.u32 %v259, 23
    %v261 = vor.u32 4788187, %v260
    %v262 = vand.u32 2147483647, %v261
    %v264 = vcvt.s32.f32 %v257
    %v265 = vmul.f32 %v264, %v262
    %v266 = vxor.u32 %v265, 2147483648
    %v267 = vsel %vm146, %v266, %v265
    %v268 = vsub.s32 4, %v244
    %v269 = vsel %vm146, %v268, %v244
    %v270 = vsel %vm145, %v142, %v267
    %v271 = vsel %vm145, 0, %v269
    %v272 = vmul.f32 %v270, %v270
    %v273 = vmul.f32 %v272, -0.001358992
    %v274 = vadd.f32 %v273, 0.041655596
    %v275 = vmul.f32 %v272, %v274
    %v276 = vadd.f32 %v275, -0.4999988
    %v277 = vmul.f32 %v272, %v276
    %v278 = vadd.f32 1.0, %v277
    %v279 = vmul.f32 %v270, %v270
    %v280 = vmul.f32 %v279, -0.00019511016
    %v281 = vadd.f32 %v280, 0.008332121
    %v282 = vmul.f32 %v279, %v281
    %v283 = vadd.f32 %v282, -0.16666654
    %v284 = vmul.f32 %v279, %v283
    %v285 = vadd.f32 %v284, 1.0
    %v286 = vmul.f32 %v285, %v270
    %vm287 = vweird.f32 %v142
    %v288 = vand.u32 %v271, 3
    %vm289 = vcmp.lt.s32.totalorder %v288, 2
    %vm290 = vcmp.eq.s32.totalorder %v288, 0
    %v291 = vxor.u32 %v286, 2147483648
    %v292 = vsel %vm290, %v278, %v291
    %vm293 = vcmp.eq.s32.totalorder %v288, 2
    %v294 = vxor.u32 %v278, 2147483648
    %v295 = vsel %vm293, %v294, %v286
    %v296 = vsel %vm289, %v292, %v295
    %v297 = vsel %vm287, nan, %v296
    %v298 = vld [vmem:[%s5] sm:$0xff]
    %v299 = vld [vmem:[%s5 + $0x8] sm:$0xff]
    %v300 = vld [vmem:[%s5 + $0x10] sm:$0xff]
    %v301 = vld [vmem:[%s5 + $0x18] sm:$0xff]
    %v302 = vld [vmem:[%s6] sm:$0xff]
    %v303 = vld [vmem:[%s6 + $0x8] sm:$0xff]
    %v304 = vld [vmem:[%s6 + $0x10] sm:$0xff]
    %v305 = vld [vmem:[%s6 + $0x18] sm:$0xff]
    %307 = vset.pattern.permute.xlu0 0
    %308 = vperm.xlu0 %307, %v302
    %v309 = vpop.permute.xlu0 %308
    %312 = vset.pattern.permute.xlu0 0
    %313 = vperm.xlu0 %312, %v303
    %v314 = vpop.permute.xlu0 %313
    %317 = vset.pattern.permute.xlu0 0
    %318 = vperm.xlu0 %317, %v304
    %v319 = vpop.permute.xlu0 %318
    %322 = vset.pattern.permute.xlu0 0
    %323 = vperm.xlu0 %322, %v305
    %v324 = vpop.permute.xlu0 %323
    %vm326 = vcmask 31744
    %v328 = vsel %vm326, %v298, 0
    %v331 = vsel %vm326, %v299, 0
    %v334 = vsel %vm326, %v300, 0
    %v337 = vsel %vm326, %v301, 0
    %vm339 = vcmask 1043456
    %v341 = vsel %vm339, %v297, 0
    %343 = vmatpush.msra.mxu0 0.0
    %344 = vmatpush.msra.mxu0 0.0
    %345 = vmatpush.msra.mxu0 0.0
    %346 = vmatpush.msra.mxu0 0.0
    %347 = vmatpush.msra.mxu0 0.0
    %348 = vmatpush.msra.mxu0 0.0
    %349 = vmatpush.msra.mxu0 0.0
    %350 = vmatpush.msra.mxu0 0.0
    %351 = vmatpush.msra.mxu0 0.0
    %352 = vmatpush.msra.mxu0 0.0
    %353 = vmatpush.msra.mxu0 0.0
    %354 = vmatpush.msra.mxu0 0.0
    %355 = vmatpush.msra.mxu0 0.0
    %356 = vmatpush.msra.mxu0 0.0
    %357 = vmatpush.msra.mxu0 0.0
    %358 = vmatpush.msra.mxu0 %v341
    %359 = vmatmul.f32.gmra.mxu0 %v328
    %v360 = vpop.f32.mrf.mxu0
    %v361 = vadd.f32 %v309, %v360
    %362 = vmatmul.f32.gmra.mxu0 %v331
    %v363 = vpop.f32.mrf.mxu0
    %v364 = vadd.f32 %v314, %v363
    %365 = vmatmul.f32.gmra.mxu0 %v334
    %v366 = vpop.f32.mrf.mxu0
    %v367 = vadd.f32 %v319, %v366
    %368 = vmatmul.f32.gmra.mxu0 %v337
    %v369 = vpop.f32.mrf.mxu0
    %v370 = vadd.f32 %v324, %v369
    %371 = vdwg.mxu0
    %v372 = vmax.f32 %v361, 0.0
    %v373 = vmax.f32 %v364, 0.0
    %v374 = vmax.f32 %v367, 0.0
    %v375 = vmax.f32 %v370, 0.0
    %v376 = vld [vmem:[%s7] sm:$0x1]
    %v377 = vld [vmem:[#allocation2] sm:$0x1]
    %379 = vset.pattern.permute.xlu0 0
    %380 = vperm.xlu0 %379, %v377
    %v381 = vpop.permute.xlu0 %380
    %v383 = vperm.slane %v381, 0
    %v385 = vsel %vm120, %v376, 0
    %387 = vmatpush.msra.mxu0 0.0
    %388 = vmatpush.msra.mxu0 0.0
    %389 = vmatpush.msra.mxu0 0.0
    %390 = vmatpush.msra.mxu0 0.0
    %391 = vmatpush.msra.mxu0 0.0
    %392 = vmatpush.msra.mxu0 0.0
    %393 = vmatpush.msra.mxu0 0.0
    %394 = vmatpush.msra.mxu0 0.0
    %395 = vmatpush.msra.mxu0 0.0
    %396 = vmatpush.msra.mxu0 0.0
    %397 = vmatpush.msra.mxu0 0.0
    %398 = vmatpush.msra.mxu0 0.0
    %399 = vmatpush.msra.mxu0 %v375
    %400 = vmatpush.msra.mxu0 %v374
    %401 = vmatpush.msra.mxu0 %v373
    %402 = vmatpush.msra.mxu0 %v372
    %403 = vmatmul.f32.gmra.mxu0 %v385
    %v404 = vpop.f32.mrf.mxu0
    %v405 = vadd.f32 %v383, %v404
    %406 = vdwg.mxu0
    %vm407 = vcmask 57344
    %408 = vst.msk [vmem:[#allocation3] sm:$0x1] %vm407, %v405
    // Predicated region
    $region38: #{tpu_custom_call.1} parent=1 // pred_check
      _
    $region39: #{tpu_custom_call.1} parent=1 // pred_check_branch
      %410 = sbr.rel (0) target = $region41
    $region40: #{tpu_custom_call.1} parent=1 // pred_region
      %412 = vsyncadd [#allocation4], 0
      %s414 = sshll.u32 [#allocation3], 4
      %s415 = int_to_ptr.vmem [resolvable:$true] %s414
      %s416 = sshll.u32 %s9, 4
      %s417 = int_to_ptr.hbm [resolvable:$true] %s416
      %419 = dma.vmem_to_hbm [thread:$0]  %s415, 16, %s417, [#allocation4]
    $region41: #{tpu_custom_call.1} parent=1 // pred_fallthru
      _
    // Predicated region
    $region42: #{tpu_custom_call.1} parent=1 // pred_check
      _
    $region43: #{tpu_custom_call.1} parent=1 // pred_check_branch
      %421 = sbr.rel (0) target = $region45
    $region44: #{tpu_custom_call.1} parent=1 // pred_region
      %423 = dma.done [#allocation4], 16
    $region45: #{tpu_custom_call.1} parent=1 // pred_fallthru
      _
    %424 = vsyncpa [#allocation4], 1

</llo_original>
